<compile_context>
chip_gen: v6e
topology: v6e:2x2x1
jax: 0.10.0
libtpu: 0.0.40
codegen_flags: <defaults>
</compile_context>

<pallas_src>
import functools

import jax
import jax.numpy as jnp
from jax.experimental import pallas as pl
from jax.experimental.pallas import tpu as pltpu

LANE = 128


# ------------------------------ small helpers --------------------------------
def _round_up(x, m):
    return ((x + m - 1) // m) * m


def _vmem_capacity_bytes(default=64 * 1024 * 1024):
    """Per-TensorCore VMEM capacity (v5e/v6e: 128 MiB, v7x: 64 MiB)."""
    try:
        info = pltpu.get_tpu_info()
        for name in ("vmem_capacity_bytes", "vmem_bytes", "vmem_size_bytes"):
            v = getattr(info, name, None)
            if v:
                return int(v)
    except Exception:
        pass
    return default


def _pick_pack(channels, hw, lane=LANE):
    """Channel-packing factor so the packed last dim is lane-dense (128-wide)."""
    if channels % lane == 0:
        return 1
    if lane % channels == 0 and hw % (lane // channels) == 0:
        return lane // channels
    return 1


# ----------------------------- Pallas kernels --------------------------------
def _ms_cam_fused_kernel(x_ref, w1l_ref, b1l_ref, w2l_ref,
                         w1g_ref, b1g_ref, w2g_ref, bcomb_ref, o_ref,
                         *, inv_hw):
    """One whole packed image per block: in-kernel global pool + global MLP,
    per-pixel local MLP, sigmoid gate.  Single HBM read/write of the image."""
    x = x_ref[0]                                         # (rows, Cp) bf16
    xf = x.astype(jnp.float32)

    # ---- global branch: pooled mean from the resident block (no 2nd HBM pass)
    colsum = jnp.sum(xf, axis=0, keepdims=True)          # (1, Cp) f32
    pooled = colsum * inv_hw                             # per-copy means; the
    #                                                     stacked W1g sums the
    #                                                     copies -> true mean
    hg = jnp.maximum(
        jnp.dot(pooled, w1g_ref[...], preferred_element_type=jnp.float32)
        + b1g_ref[...], 0.0)                             # (1, Igp) f32
    # bias = global logits + (local b2 + global b2), broadcast over all pixels
    bias = (jnp.dot(hg, w2g_ref[...], preferred_element_type=jnp.float32)
            + bcomb_ref[...])                            # (1, Cp) f32

    # ---- local branch: per-pixel channel MLP (MXU, f32 accumulation) ----
    h = jnp.dot(x, w1l_ref[...], preferred_element_type=jnp.float32) + b1l_ref[...]
    h = jnp.maximum(h, 0.0).astype(w2l_ref.dtype)        # (rows, Hp) bf16
    z = jnp.dot(h, w2l_ref[...], preferred_element_type=jnp.float32) + bias

    # ---- gate: sigmoid via exp + approx reciprocal (both on the EUP) ----
    wei = pl.reciprocal(1.0 + jnp.exp(-z), approx=True)
    # f32 gate multiply (v5e-safe, best accuracy); bf16 gate is fine on v6e/v7x.
    o_ref[0] = (xf * wei).astype(o_ref.dtype)


def _ms_cam_tiled_kernel(x_ref, bias_ref, w1l_ref, b1l_ref, w2l_ref, o_ref):
    """Fallback for images too large for one VMEM block: the global-branch
    logits (already combined with b2) arrive as a tiny per-batch bias."""
    x = x_ref[0]                                         # (T, Cp) bf16
    h = jnp.dot(x, w1l_ref[...], preferred_element_type=jnp.float32) + b1l_ref[...]
    h = jnp.maximum(h, 0.0).astype(w2l_ref.dtype)
    z = jnp.dot(h, w2l_ref[...], preferred_element_type=jnp.float32) + bias_ref[0]
    wei = pl.reciprocal(1.0 + jnp.exp(-z), approx=True)
    o_ref[0] = (x.astype(jnp.float32) * wei).astype(o_ref.dtype)


# -------------------------------- wrapper -------------------------------------
def ms_cam_pallas(x_nhwc, prep, *, compute_dtype=jnp.bfloat16, max_rows=8192):
    """x_nhwc: (N, H, W, C) feature map.  prep: output of prepare_params()."""
    N, H, W, C = x_nhwc.shape
    HW = H * W
    pack = prep["pack"]
    assert C == prep["channels"] and HW % pack == 0
    Cp = pack * C
    rows = HW // pack

    w1l, b1l, w2l = prep["w1l"], prep["b1l"], prep["w2l"]
    Hp = w1l.shape[1]

    # exact lane-dense packed view: row i = [pixel i*pack, ..., pixel i*pack+pack-1]
    x = x_nhwc.astype(compute_dtype).reshape(N, rows, Cp)

    # ---- per-generation VMEM budgets (v7x: 64 MiB, v5e/v6e: 128 MiB) ----
    cap = _vmem_capacity_bytes()
    vmem_limit = int(min((cap * 3) // 4, 100 * 1024 * 1024))
    io_budget = cap // 3

    # rough per-row VMEM cost: double-buffered bf16 x/out tiles plus the f32 /
    # bf16 row temporaries (xf, h, z, wei) the compiler materializes
    per_row = Cp * (4 * 2 + 12) + Hp * 6
    fused_ok = rows * per_row <= io_budget

    def resident(arr, ngrid):
        zeros = (0,) * arr.ndim
        if ngrid == 1:
            idx = lambda n, _z=zeros: _z
        else:
            idx = lambda n, t, _z=zeros: _z
        return pl.BlockSpec(arr.shape, idx)

    if fused_ok:
        # single-pass fused path: pooled mean computed in-kernel
        kernel = functools.partial(_ms_cam_fused_kernel, inv_hw=1.0 / float(HW))
        out = pl.pallas_call(
            kernel,
            out_shape=jax.ShapeDtypeStruct((N, rows, Cp), compute_dtype),
            grid=(N,),
            in_specs=[
                pl.BlockSpec((1, rows, Cp), lambda n: (n, 0, 0)),
                resident(w1l, 1), resident(b1l, 1), resident(w2l, 1),
                resident(prep["w1g"], 1), resident(prep["b1g"], 1),
                resident(prep["w2g"], 1), resident(prep["bcomb"], 1),
            ],
            out_specs=pl.BlockSpec((1, rows, Cp), lambda n: (n, 0, 0)),
            compiler_params=pltpu.CompilerParams(
                dimension_semantics=("parallel",),
                vmem_limit_bytes=vmem_limit),
        )(x, w1l, b1l, w2l, prep["w1g"], prep["b1g"], prep["w2g"], prep["bcomb"])
    else:
        # image does not fit one VMEM block: hoist the tiny global branch
        # (costs one extra HBM read of x) and tile the HW axis.
        w1g_t, b1g_r, w2g_t, b2g_r = prep["g_raw"]
        pooled = jnp.mean(x_nhwc.astype(jnp.float32), axis=(1, 2))       # (N, C)
        hg = jnp.maximum(pooled @ w1g_t + b1g_r, 0.0)
        xg = hg @ w2g_t + b2g_r                                          # (N, C)
        bias = jnp.tile((xg + prep["b2l"])[:, None, :], (1, 1, pack))    # (N,1,Cp)
        bias = bias.astype(jnp.float32)

        T = min(max_rows, max(16, io_budget // per_row))
        if N == 1:                       # keep >= 2 programs for v7x megacore
            T = min(T, _round_up((rows + 1) // 2, 16))
        if T >= rows:
            T = rows                     # block equals the full row dim
        else:
            T = max(16, (T // 16) * 16)  # bf16 sublane packing: multiple of 16
        grid = (N, pl.cdiv(rows, T))     # ragged tail masked by Pallas (no pad)

        out = pl.pallas_call(
            _ms_cam_tiled_kernel,
            out_shape=jax.ShapeDtypeStruct((N, rows, Cp), compute_dtype),
            grid=grid,
            in_specs=[
                pl.BlockSpec((1, T, Cp), lambda n, t: (n, t, 0)),
                pl.BlockSpec((1, 1, Cp), lambda n, t: (n, 0, 0)),
                resident(w1l, 2), resident(b1l, 2), resident(w2l, 2),
            ],
            out_specs=pl.BlockSpec((1, T, Cp), lambda n, t: (n, t, 0)),
            compiler_params=pltpu.CompilerParams(
                dimension_semantics=("parallel", "parallel"),
                vmem_limit_bytes=vmem_limit),
        )(x, bias, w1l, b1l, w2l)

    return out.reshape(N, H, W, C)


# ------------------------ parameter setup / folding ---------------------------
def make_params(key, channels, r):
    """Deterministic synthetic params matching nn.Conv2d(1x1)+nn.BatchNorm2d."""
    inter = channels // r
    keys = jax.random.split(key, 24)
    ki = iter(range(24))

    def conv(cout, cin):
        w = 0.1 * jax.random.normal(keys[next(ki)], (cout, cin), jnp.float32)
        b = 0.1 * jax.random.normal(keys[next(ki)], (cout,), jnp.float32)
        return w, b

    def bn(c):
        gamma = 1.0 + 0.1 * jax.random.normal(keys[next(ki)], (c,), jnp.float32)
        beta = 0.1 * jax.random.normal(keys[next(ki)], (c,), jnp.float32)
        mean = 0.1 * jax.random.normal(keys[next(ki)], (c,), jnp.float32)
        var = 1.0 + 0.1 * jax.random.uniform(keys[next(ki)], (c,), jnp.float32)
        return gamma, beta, mean, var

    p = {}
    p["l_w1"], p["l_b1"] = conv(inter, channels)
    p["l_bn1"] = bn(inter)
    p["l_w2"], p["l_b2"] = conv(channels, inter)
    p["l_bn2"] = bn(channels)
    p["g_w1"], p["g_b1"] = conv(inter, channels)
    p["g_bn1"] = bn(inter)
    p["g_w2"], p["g_b2"] = conv(channels, inter)
    p["g_bn2"] = bn(channels)
    return p


def fold_bn(w, b, bn_params, eps=1e-5):
    """Fold eval-mode BatchNorm into a (cout, cin) 1x1-conv weight/bias."""
    gamma, beta, mean, var = bn_params
    scale = gamma / jnp.sqrt(var + eps)
    return w * scale[:, None], (b - mean) * scale + beta


def prepare_params(p, channels, pack, compute_dtype=jnp.bfloat16, lane=LANE):
    """Fold BN and build lane-dense packed (block-diagonal) kernel weights."""
    w1l, b1l = fold_bn(p["l_w1"], p["l_b1"], p["l_bn1"])   # (I, C), (I,)
    w2l, b2l = fold_bn(p["l_w2"], p["l_b2"], p["l_bn2"])   # (C, I), (C,)
    w1g, b1g = fold_bn(p["g_w1"], p["g_b1"], p["g_bn1"])
    w2g, b2g = fold_bn(p["g_w2"], p["g_b2"], p["g_bn2"])

    C = channels
    inter = w1l.shape[0]
    Cp = pack * C
    # pad the local hidden dim only as far as needed so the *packed* hidden
    # width is a multiple of 128 lanes (exact: padded units -> relu(0) -> 0)
    Hl = _round_up(pack * max(inter, 1), lane) // pack
    Hp = pack * Hl

    W1 = jnp.zeros((C, Hl), jnp.float32).at[:, :inter].set(w1l.T)
    B1 = jnp.zeros((Hl,), jnp.float32).at[:inter].set(b1l)
    W2 = jnp.zeros((Hl, C), jnp.float32).at[:inter, :].set(w2l.T)

    # block-diagonal local weights: each packed pixel copy gets its own block
    W1p = jnp.zeros((Cp, Hp), jnp.float32)
    W2p = jnp.zeros((Hp, Cp), jnp.float32)
    for k in range(pack):
        W1p = W1p.at[k * C:(k + 1) * C, k * Hl:(k + 1) * Hl].set(W1)
        W2p = W2p.at[k * Hl:(k + 1) * Hl, k * C:(k + 1) * C].set(W2)
    B1p = jnp.tile(B1, pack)[None, :]                        # (1, Hp) f32

    # global branch (f32, tiny): vertical stack of W1g sums the packed copies'
    # column-sums (=> true all-pixel sum); horizontal tile of W2g / the bias
    # replicates the global logits into every packed copy's channel block.
    ig = w1g.shape[0]
    Igp = _round_up(ig, lane)
    W1G = jnp.zeros((C, Igp), jnp.float32).at[:, :ig].set(w1g.T)
    W2G = jnp.zeros((Igp, C), jnp.float32).at[:ig, :].set(w2g.T)
    W1Gp = jnp.tile(W1G, (pack, 1))                          # (Cp, Igp)
    B1G = jnp.zeros((1, Igp), jnp.float32).at[:, :ig].set(b1g[None, :])
    W2Gp = jnp.tile(W2G, (1, pack))                          # (Igp, Cp)
    BCOMB = jnp.tile((b2l + b2g)[None, :], (1, pack))        # (1, Cp) f32

    return {
        "channels": C, "pack": pack,
        "w1l": W1p.astype(compute_dtype), "b1l": B1p,
        "w2l": W2p.astype(compute_dtype),
        "w1g": W1Gp, "b1g": B1G, "w2g": W2Gp, "bcomb": BCOMB,
        # unpacked f32 pieces for the hoisted-pool fallback path
        "g_raw": (w1g.T, b1g, w2g.T, b2g), "b2l": b2l,
    }


# ------------------------- pure-JAX reference (NHWC) --------------------------
def ms_cam_reference(x, p, eps=1e-5):
    def conv1x1(x, w, b):
        return jnp.einsum("nhwc,oc->nhwo", x, w) + b

    def bn(x, bn_params):
        gamma, beta, mean, var = bn_params
        return (x - mean) / jnp.sqrt(var + eps) * gamma + beta

    xl = bn(conv1x1(x, p["l_w1"], p["l_b1"]), p["l_bn1"])
    xl = jnp.maximum(xl, 0.0)
    xl = bn(conv1x1(xl, p["l_w2"], p["l_b2"]), p["l_bn2"])

    xg = jnp.mean(x, axis=(1, 2), keepdims=True)
    xg = bn(conv1x1(xg, p["g_w1"], p["g_b1"]), p["g_bn1"])
    xg = jnp.maximum(xg, 0.0)
    xg = bn(conv1x1(xg, p["g_w2"], p["g_b2"]), p["g_bn2"])

    wei = jax.nn.sigmoid(xl + xg)
    return x * wei


# ---------------------------------- main --------------------------------------
if __name__ == "__main__":
    N, C, H, W, r = 2, 64, 16, 16, 4          # module defaults: channels=64, r=4

    key = jax.random.PRNGKey(0)
    kx, kp = jax.random.split(key)
    x_f32 = jax.random.normal(kx, (N, H, W, C), jnp.float32)   # NHWC end-to-end

    params = make_params(kp, C, r)
    pack = _pick_pack(C, H * W)                                # C=64 -> pack=2
    prep = prepare_params(params, C, pack, compute_dtype=jnp.bfloat16)

    # bf16 HBM-resident activations (halves memory traffic on this
    # bandwidth-bound op).  Reference uses the same bf16 values upcast to f32,
    # so the comparison only sees in-kernel bf16/approx-sigmoid rounding.
    x_bf16 = x_f32.astype(jnp.bfloat16)

    out = ms_cam_pallas(x_bf16, prep)
    out = jax.block_until_ready(out)

    ref = ms_cam_reference(x_bf16.astype(jnp.float32), params)
    assert out.shape == ref.shape == (N, H, W, C)
    err = float(jnp.max(jnp.abs(out.astype(jnp.float32) - ref)))
    assert jnp.allclose(out.astype(jnp.float32), ref, atol=5e-2, rtol=5e-2), err

    print("KERNEL_OK")
</pallas_src>

<mosaic_0001>
module attributes {stable_mosaic.version = 11 : i64} {
  func.func @_ms_cam_fused_kernel(%arg0: i32, %arg1: memref<1x128x128xbf16, #tpu.memory_space<vmem>>, %arg2: memref<128x128xbf16, #tpu.memory_space<vmem>>, %arg3: memref<1x128xf32, #tpu.memory_space<vmem>>, %arg4: memref<128x128xbf16, #tpu.memory_space<vmem>>, %arg5: memref<128x128xf32, #tpu.memory_space<vmem>>, %arg6: memref<1x128xf32, #tpu.memory_space<vmem>>, %arg7: memref<128x128xf32, #tpu.memory_space<vmem>>, %arg8: memref<1x128xf32, #tpu.memory_space<vmem>>, %arg9: memref<1x128x128xbf16, #tpu.memory_space<vmem>>) attributes {dimension_semantics = [#tpu.dimension_semantics<parallel>], iteration_bounds = array<i64: 2>, scalar_prefetch = 0 : i64, scratch_operands = 0 : i64, tpu.core_type = #tpu.core_type<tc>, window_params = [{transform_indices = @transform_0, window_bounds = array<i64: 1, 128, 128>}, {pipeline_mode = #tpu.pipeline_mode<synchronous>, transform_indices = @transform_1, window_bounds = array<i64: 128, 128>}, {pipeline_mode = #tpu.pipeline_mode<synchronous>, transform_indices = @transform_2, window_bounds = array<i64: 1, 128>}, {pipeline_mode = #tpu.pipeline_mode<synchronous>, transform_indices = @transform_3, window_bounds = array<i64: 128, 128>}, {pipeline_mode = #tpu.pipeline_mode<synchronous>, transform_indices = @transform_4, window_bounds = array<i64: 128, 128>}, {pipeline_mode = #tpu.pipeline_mode<synchronous>, transform_indices = @transform_5, window_bounds = array<i64: 1, 128>}, {pipeline_mode = #tpu.pipeline_mode<synchronous>, transform_indices = @transform_6, window_bounds = array<i64: 128, 128>}, {pipeline_mode = #tpu.pipeline_mode<synchronous>, transform_indices = @transform_7, window_bounds = array<i64: 1, 128>}, {transform_indices = @transform_8, window_bounds = array<i64: 1, 128, 128>}]} {
    %c0 = arith.constant 0 : index
    %c0_0 = arith.constant 0 : index
    %c0_1 = arith.constant 0 : index
    %0 = vector.load %arg1[%c0, %c0_0, %c0_1] : memref<1x128x128xbf16, #tpu.memory_space<vmem>>, vector<1x128x128xbf16>
    %1 = vector.shape_cast %0 : vector<1x128x128xbf16> to vector<128x128xbf16>
    %2 = arith.extf %1 : vector<128x128xbf16> to vector<128x128xf32>
    %cst = arith.constant dense<0.000000e+00> : vector<128xf32>
    %3 = vector.multi_reduction <add>, %2, %cst [0] : vector<128x128xf32> to vector<128xf32>
    %4 = vector.shape_cast %3 : vector<128xf32> to vector<1x128xf32>
    %cst_2 = arith.constant 3.906250e-03 : f32
    %5 = vector.broadcast %cst_2 : f32 to vector<1x128xf32>
    %6 = arith.mulf %4, %5 : vector<1x128xf32>
    %c0_3 = arith.constant 0 : index
    %c0_4 = arith.constant 0 : index
    %7 = vector.load %arg5[%c0_3, %c0_4] : memref<128x128xf32, #tpu.memory_space<vmem>>, vector<128x128xf32>
    %cst_5 = arith.constant dense<0.000000e+00> : vector<1x128xf32>
    %8 = tpu.matmul %6, %7, %cst_5 {dimension_numbers = #tpu.dot_dimension_numbers<[1], [0], [0], [1], [0, 0, 1, 1], [], []>} : vector<1x128xf32>, vector<128x128xf32>, vector<1x128xf32> -> vector<1x128xf32>
    %c0_6 = arith.constant 0 : index
    %c0_7 = arith.constant 0 : index
    %9 = vector.load %arg6[%c0_6, %c0_7] : memref<1x128xf32, #tpu.memory_space<vmem>>, vector<1x128xf32>
    %10 = arith.addf %8, %9 : vector<1x128xf32>
    %cst_8 = arith.constant 0.000000e+00 : f32
    %11 = vector.broadcast %cst_8 : f32 to vector<1x128xf32>
    %12 = arith.maximumf %10, %11 : vector<1x128xf32>
    %c0_9 = arith.constant 0 : index
    %c0_10 = arith.constant 0 : index
    %13 = vector.load %arg7[%c0_9, %c0_10] : memref<128x128xf32, #tpu.memory_space<vmem>>, vector<128x128xf32>
    %cst_11 = arith.constant dense<0.000000e+00> : vector<1x128xf32>
    %14 = tpu.matmul %12, %13, %cst_11 {dimension_numbers = #tpu.dot_dimension_numbers<[1], [0], [0], [1], [0, 0, 1, 1], [], []>} : vector<1x128xf32>, vector<128x128xf32>, vector<1x128xf32> -> vector<1x128xf32>
    %c0_12 = arith.constant 0 : index
    %c0_13 = arith.constant 0 : index
    %15 = vector.load %arg8[%c0_12, %c0_13] : memref<1x128xf32, #tpu.memory_space<vmem>>, vector<1x128xf32>
    %16 = arith.addf %14, %15 : vector<1x128xf32>
    %c0_14 = arith.constant 0 : index
    %c0_15 = arith.constant 0 : index
    %17 = vector.load %arg2[%c0_14, %c0_15] : memref<128x128xbf16, #tpu.memory_space<vmem>>, vector<128x128xbf16>
    %cst_16 = arith.constant dense<0.000000e+00> : vector<128x128xf32>
    %18 = tpu.matmul %1, %17, %cst_16 {dimension_numbers = #tpu.dot_dimension_numbers<[1], [0], [0], [1], [0, 0, 1, 1], [], []>} : vector<128x128xbf16>, vector<128x128xbf16>, vector<128x128xf32> -> vector<128x128xf32>
    %c0_17 = arith.constant 0 : index
    %c0_18 = arith.constant 0 : index
    %19 = vector.load %arg3[%c0_17, %c0_18] : memref<1x128xf32, #tpu.memory_space<vmem>>, vector<1x128xf32>
    %20 = vector.broadcast %19 : vector<1x128xf32> to vector<128x128xf32>
    %21 = arith.addf %18, %20 : vector<128x128xf32>
    %cst_19 = arith.constant 0.000000e+00 : f32
    %22 = vector.broadcast %cst_19 : f32 to vector<128x128xf32>
    %23 = arith.maximumf %21, %22 : vector<128x128xf32>
    %24 = arith.truncf %23 : vector<128x128xf32> to vector<128x128xbf16>
    %c0_20 = arith.constant 0 : index
    %c0_21 = arith.constant 0 : index
    %25 = vector.load %arg4[%c0_20, %c0_21] : memref<128x128xbf16, #tpu.memory_space<vmem>>, vector<128x128xbf16>
    %cst_22 = arith.constant dense<0.000000e+00> : vector<128x128xf32>
    %26 = tpu.matmul %24, %25, %cst_22 {dimension_numbers = #tpu.dot_dimension_numbers<[1], [0], [0], [1], [0, 0, 1, 1], [], []>} : vector<128x128xbf16>, vector<128x128xbf16>, vector<128x128xf32> -> vector<128x128xf32>
    %27 = vector.broadcast %16 : vector<1x128xf32> to vector<128x128xf32>
    %28 = arith.addf %26, %27 : vector<128x128xf32>
    %cst_23 = arith.constant 0.000000e+00 : f32
    %29 = vector.broadcast %cst_23 : f32 to vector<128x128xf32>
    %30 = arith.subf %29, %28 : vector<128x128xf32>
    %31 = math.exp %30 : vector<128x128xf32>
    %cst_24 = arith.constant 1.000000e+00 : f32
    %32 = vector.broadcast %cst_24 : f32 to vector<128x128xf32>
    %33 = arith.addf %32, %31 : vector<128x128xf32>
    %34 = tpu.reciprocal %33 {approx = true} : vector<128x128xf32> -> vector<128x128xf32>
    %35 = arith.mulf %2, %34 : vector<128x128xf32>
    %36 = arith.truncf %35 : vector<128x128xf32> to vector<128x128xbf16>
    %c0_25 = arith.constant 0 : index
    %c0_26 = arith.constant 0 : index
    %c0_27 = arith.constant 0 : index
    %37 = vector.load %arg9[%c0_25, %c0_26, %c0_27] : memref<1x128x128xbf16, #tpu.memory_space<vmem>>, vector<1x128x128xbf16>
    %38 = vector.shape_cast %37 : vector<1x128x128xbf16> to vector<128x128xbf16>
    %39 = vector.shape_cast %36 : vector<128x128xbf16> to vector<1x128x128xbf16>
    tpu.vector_store %arg9[%c0_25, %c0_26, %c0_27], %39 {strides = array<i32>} : memref<1x128x128xbf16, #tpu.memory_space<vmem>>, vector<1x128x128xbf16>,
    return
  }
  func.func @transform_0(%arg0: i32) -> (i32, i32, i32) {
    %c0_i32 = arith.constant 0 : i32
    %c0_i32_0 = arith.constant 0 : i32
    %c0_i32_1 = arith.constant 0 : i32
    return %arg0, %c0_i32, %c0_i32_0 : i32, i32, i32
  }
  func.func @transform_1(%arg0: i32) -> (i32, i32) {
    %c0_i32 = arith.constant 0 : i32
    %c0_i32_0 = arith.constant 0 : i32
    %c0_i32_1 = arith.constant 0 : i32
    return %c0_i32, %c0_i32_0 : i32, i32
  }
  func.func @transform_2(%arg0: i32) -> (i32, i32) {
    %c0_i32 = arith.constant 0 : i32
    %c0_i32_0 = arith.constant 0 : i32
    %c0_i32_1 = arith.constant 0 : i32
    return %c0_i32, %c0_i32_0 : i32, i32
  }
  func.func @transform_3(%arg0: i32) -> (i32, i32) {
    %c0_i32 = arith.constant 0 : i32
    %c0_i32_0 = arith.constant 0 : i32
    %c0_i32_1 = arith.constant 0 : i32
    return %c0_i32, %c0_i32_0 : i32, i32
  }
  func.func @transform_4(%arg0: i32) -> (i32, i32) {
    %c0_i32 = arith.constant 0 : i32
    %c0_i32_0 = arith.constant 0 : i32
    %c0_i32_1 = arith.constant 0 : i32
    return %c0_i32, %c0_i32_0 : i32, i32
  }
  func.func @transform_5(%arg0: i32) -> (i32, i32) {
    %c0_i32 = arith.constant 0 : i32
    %c0_i32_0 = arith.constant 0 : i32
    %c0_i32_1 = arith.constant 0 : i32
    return %c0_i32, %c0_i32_0 : i32, i32
  }
  func.func @transform_6(%arg0: i32) -> (i32, i32) {
    %c0_i32 = arith.constant 0 : i32
    %c0_i32_0 = arith.constant 0 : i32
    %c0_i32_1 = arith.constant 0 : i32
    return %c0_i32, %c0_i32_0 : i32, i32
  }
  func.func @transform_7(%arg0: i32) -> (i32, i32) {
    %c0_i32 = arith.constant 0 : i32
    %c0_i32_0 = arith.constant 0 : i32
    %c0_i32_1 = arith.constant 0 : i32
    return %c0_i32, %c0_i32_0 : i32, i32
  }
  func.func @transform_8(%arg0: i32) -> (i32, i32, i32) {
    %c0_i32 = arith.constant 0 : i32
    %c0_i32_0 = arith.constant 0 : i32
    %c0_i32_1 = arith.constant 0 : i32
    return %arg0, %c0_i32, %c0_i32_0 : i32, i32, i32
  }
}

</mosaic_0001>

<llo_original>
// kernel: tpu_custom_call.1
$region0: #{tpu_custom_call.1}
  #allocation0 [shape = 'u32[]', space=smem, size = 0x4, offset = 0x4, fixed_abs, tag = 'smem constant byte address 0x4 - core index']
  #allocation1 [shape = 'u32[144,128]{1,0:T(1,128)}', space=vmem, size = 0x12000, scoped, tag = 'internal scratch']
  %s0 = inlined_call_operand.hbm [shape: bf16[2,128,128], index: 0, kind: input, shape index: {}]
  %s1 = inlined_call_operand.hbm [shape: bf16[128,128], index: 1, kind: input, shape index: {}]
  %s2 = inlined_call_operand.vmem [shape: f32[1,128], index: 2, kind: input, shape index: {}]
  %s3 = inlined_call_operand.hbm [shape: bf16[128,128], index: 3, kind: input, shape index: {}]
  %s4 = inlined_call_operand.hbm [shape: f32[128,128], index: 4, kind: input, shape index: {}]
  %s5 = inlined_call_operand.vmem [shape: f32[1,128], index: 5, kind: input, shape index: {}]
  %s6 = inlined_call_operand.hbm [shape: f32[128,128], index: 6, kind: input, shape index: {}]
  %s7 = inlined_call_operand.vmem [shape: f32[1,128], index: 7, kind: input, shape index: {}]
  %s8 = inlined_call_operand.hbm [shape: bf16[2,128,128], index: 8, kind: output, shape index: {}]
  %s9 = sld [smem:[#allocation0]]
  $region85: #{tpu_custom_call.1} parent=0
    _
  %s11 = ssub.s32 1, %s9
  %s12 = scalar_select 0, %s11, %s9
  $region1: #{tpu_custom_call.1} parent=0
    #allocation2 [shape = 'u8[65536]{0}', space=vmem, size = 0x10000, scoped, tag = 'input window, operand 0']
    #allocation3 [shape = 's32[2]{0}', space=sflag, size = 0x8, scoped, tag = 'scoped memory for tpu_custom_call.1']
    #allocation4 [shape = 's32[2]{0}', space=sflag, size = 0x8, scoped, tag = 'scoped memory for tpu_custom_call.1']
    #allocation5 [shape = 'u8[32768]{0}', space=vmem, size = 0x8000, scoped, tag = 'input window, operand 1, single buffered']
    #allocation6 [shape = 's32[1]{0}', space=sflag, size = 0x4, scoped, tag = 'scoped memory for tpu_custom_call.1']
    #allocation7 [shape = 'u8[32768]{0}', space=vmem, size = 0x8000, scoped, tag = 'input window, operand 3, single buffered']
    #allocation8 [shape = 'u8[65536]{0}', space=vmem, size = 0x10000, scoped, tag = 'input window, operand 4, single buffered']
    #allocation9 [shape = 's32[1]{0}', space=sflag, size = 0x4, scoped, tag = 'scoped memory for tpu_custom_call.1']
    #allocation10 [shape = 'u8[65536]{0}', space=vmem, size = 0x10000, scoped, tag = 'input window, operand 6, single buffered']
    #allocation11 [shape = 'u8[65536]{0}', space=vmem, size = 0x10000, scoped, tag = 'output window, operand 0']
    %13 = vsyncpa [#allocation3], 0
    %s14 = scalar_lea.sflag [#allocation3], 1
    %15 = vsyncpa %s14, 0
    %16 = vsyncpa [#allocation6], 0
    %17 = vsyncpa [#allocation9], 0
    %18 = vsyncpa [#allocation4], 0
    %s19 = scalar_lea.sflag [#allocation4], 1
    %20 = vsyncpa %s19, 0
    loop: start=0, step=1, limit=4
    $region2: #{tpu_custom_call.1} parent=1 // loop_pre_header
      _
    $region3: #{tpu_custom_call.1} parent=1 // loop_header
      %s22 = sphi 0, %s26
      %p23 = scmp.ge.s32.totalorder %s22, 4
      %s32 = sphi 0, %s34
      %s35 = sphi 0, %s32
      %s36 = sphi 0, %s35
      %s52 = sphi 0, %s36
      %s56 = sphi 0, %s56
      %s58 = sphi 0, %s56
      %s59 = sphi 0, %s58
      %s73 = sphi 0, %s59
      %s77 = sphi 0, %s77
      %s79 = sphi 0, %s77
      %s80 = sphi 0, %s79
      %s94 = sphi 0, %s80
      %s98 = sphi 0, %s98
      %s100 = sphi 0, %s98
      %s101 = sphi 0, %s100
      %s115 = sphi 0, %s101
      %s119 = sphi 0, %s119
      %s121 = sphi 0, %s119
      %s122 = sphi 0, %s121
      %s136 = sphi 0, %s122
      %s140 = sphi 0, %s140
      %s142 = sphi 0, %s140
      %s143 = sphi 0, %s142
      %s157 = sphi 0, %s143
      %s161 = sphi 0, %s161
      %s163 = sphi 0, %s161
      %s164 = sphi 0, %s163
      %s178 = sphi 0, %s164
      %s182 = sphi 0, %s182
      %s184 = sphi 0, %s182
      %s185 = sphi 0, %s184
      %s199 = sphi 0, %s185
      %s205 = sphi 0, %s207
      %s208 = sphi 0, %s205
      %s209 = sphi 0, %s208
      %s225 = sphi 0, %s209
    $region4: #{tpu_custom_call.1} parent=1 // loop_header_branch
      %25 = sbr.rel (%p23) target = $region8
    $region5: #{tpu_custom_call.1} parent=1 // loop_body
      %s27 = ssub.s32 %s22, 1
      %s28 = ssub.s32 %s22, 2
      %s29 = sadd.s32 %s22, 1
      %s30 = ssub.s32 %s22, %s29
      %p31 = scmp.eq.s32.totalorder %s30, 0
      %s33 = sadd.s32 %s32, 1
      %s34 = scalar_select %p31, %s32, %s33
      %p37 = pneg %p31
      %p38 = scmp.eq.s32.totalorder %s22, 1
      %p39 = por %p37, %p38
      %p40 = scmp.ne.s32.totalorder %s32, %s35
      %p41 = scmp.eq.s32.totalorder %s22, 0
      %p42 = por %p40, %p41
      %p43 = scmp.ne.s32.totalorder %s32, %s35
      %p44 = scmp.eq.s32.totalorder %s27, 1
      %p45 = por %p43, %p44
      %p46 = scmp.ne.s32.totalorder %s35, %s36
      %p47 = scmp.eq.s32.totalorder %s27, 0
      %p48 = por %p46, %p47
      %p49 = scmp.ne.s32.totalorder %s35, %s36
      %p50 = scmp.eq.s32.totalorder %s28, 1
      %p51 = por %p49, %p50
      %p53 = scmp.ne.s32.totalorder %s36, %s52
      %p54 = scmp.eq.s32.totalorder %s28, 0
      %p55 = por %p53, %p54
      %s57 = sadd.s32 %s56, 1
      %p60 = scmp.eq.s32.totalorder %s22, 1
      %p61 = scmp.ne.s32.totalorder %s56, %s58
      %p62 = scmp.eq.s32.totalorder %s22, 0
      %p63 = por %p61, %p62
      %p64 = scmp.ne.s32.totalorder %s56, %s58
      %p65 = scmp.eq.s32.totalorder %s27, 1
      %p66 = por %p64, %p65
      %p67 = scmp.ne.s32.totalorder %s58, %s59
      %p68 = scmp.eq.s32.totalorder %s27, 0
      %p69 = por %p67, %p68
      %p70 = scmp.ne.s32.totalorder %s58, %s59
      %p71 = scmp.eq.s32.totalorder %s28, 1
      %p72 = por %p70, %p71
      %p74 = scmp.ne.s32.totalorder %s59, %s73
      %p75 = scmp.eq.s32.totalorder %s28, 0
      %p76 = por %p74, %p75
      %s78 = sadd.s32 %s77, 1
      %p81 = scmp.eq.s32.totalorder %s22, 1
      %p82 = scmp.ne.s32.totalorder %s77, %s79
      %p83 = scmp.eq.s32.totalorder %s22, 0
      %p84 = por %p82, %p83
      %p85 = scmp.ne.s32.totalorder %s77, %s79
      %p86 = scmp.eq.s32.totalorder %s27, 1
      %p87 = por %p85, %p86
      %p88 = scmp.ne.s32.totalorder %s79, %s80
      %p89 = scmp.eq.s32.totalorder %s27, 0
      %p90 = por %p88, %p89
      %p91 = scmp.ne.s32.totalorder %s79, %s80
      %p92 = scmp.eq.s32.totalorder %s28, 1
      %p93 = por %p91, %p92
      %p95 = scmp.ne.s32.totalorder %s80, %s94
      %p96 = scmp.eq.s32.totalorder %s28, 0
      %p97 = por %p95, %p96
      %s99 = sadd.s32 %s98, 1
      %p102 = scmp.eq.s32.totalorder %s22, 1
      %p103 = scmp.ne.s32.totalorder %s98, %s100
      %p104 = scmp.eq.s32.totalorder %s22, 0
      %p105 = por %p103, %p104
      %p106 = scmp.ne.s32.totalorder %s98, %s100
      %p107 = scmp.eq.s32.totalorder %s27, 1
      %p108 = por %p106, %p107
      %p109 = scmp.ne.s32.totalorder %s100, %s101
      %p110 = scmp.eq.s32.totalorder %s27, 0
      %p111 = por %p109, %p110
      %p112 = scmp.ne.s32.totalorder %s100, %s101
      %p113 = scmp.eq.s32.totalorder %s28, 1
      %p114 = por %p112, %p113
      %p116 = scmp.ne.s32.totalorder %s101, %s115
      %p117 = scmp.eq.s32.totalorder %s28, 0
      %p118 = por %p116, %p117
      %s120 = sadd.s32 %s119, 1
      %p123 = scmp.eq.s32.totalorder %s22, 1
      %p124 = scmp.ne.s32.totalorder %s119, %s121
      %p125 = scmp.eq.s32.totalorder %s22, 0
      %p126 = por %p124, %p125
      %p127 = scmp.ne.s32.totalorder %s119, %s121
      %p128 = scmp.eq.s32.totalorder %s27, 1
      %p129 = por %p127, %p128
      %p130 = scmp.ne.s32.totalorder %s121, %s122
      %p131 = scmp.eq.s32.totalorder %s27, 0
      %p132 = por %p130, %p131
      %p133 = scmp.ne.s32.totalorder %s121, %s122
      %p134 = scmp.eq.s32.totalorder %s28, 1
      %p135 = por %p133, %p134
      %p137 = scmp.ne.s32.totalorder %s122, %s136
      %p138 = scmp.eq.s32.totalorder %s28, 0
      %p139 = por %p137, %p138
      %s141 = sadd.s32 %s140, 1
      %p144 = scmp.eq.s32.totalorder %s22, 1
      %p145 = scmp.ne.s32.totalorder %s140, %s142
      %p146 = scmp.eq.s32.totalorder %s22, 0
      %p147 = por %p145, %p146
      %p148 = scmp.ne.s32.totalorder %s140, %s142
      %p149 = scmp.eq.s32.totalorder %s27, 1
      %p150 = por %p148, %p149
      %p151 = scmp.ne.s32.totalorder %s142, %s143
      %p152 = scmp.eq.s32.totalorder %s27, 0
      %p153 = por %p151, %p152
      %p154 = scmp.ne.s32.totalorder %s142, %s143
      %p155 = scmp.eq.s32.totalorder %s28, 1
      %p156 = por %p154, %p155
      %p158 = scmp.ne.s32.totalorder %s143, %s157
      %p159 = scmp.eq.s32.totalorder %s28, 0
      %p160 = por %p158, %p159
      %s162 = sadd.s32 %s161, 1
      %p165 = scmp.eq.s32.totalorder %s22, 1
      %p166 = scmp.ne.s32.totalorder %s161, %s163
      %p167 = scmp.eq.s32.totalorder %s22, 0
      %p168 = por %p166, %p167
      %p169 = scmp.ne.s32.totalorder %s161, %s163
      %p170 = scmp.eq.s32.totalorder %s27, 1
      %p171 = por %p169, %p170
      %p172 = scmp.ne.s32.totalorder %s163, %s164
      %p173 = scmp.eq.s32.totalorder %s27, 0
      %p174 = por %p172, %p173
      %p175 = scmp.ne.s32.totalorder %s163, %s164
      %p176 = scmp.eq.s32.totalorder %s28, 1
      %p177 = por %p175, %p176
      %p179 = scmp.ne.s32.totalorder %s164, %s178
      %p180 = scmp.eq.s32.totalorder %s28, 0
      %p181 = por %p179, %p180
      %s183 = sadd.s32 %s182, 1
      %p186 = scmp.eq.s32.totalorder %s22, 1
      %p187 = scmp.ne.s32.totalorder %s182, %s184
      %p188 = scmp.eq.s32.totalorder %s22, 0
      %p189 = por %p187, %p188
      %p190 = scmp.ne.s32.totalorder %s182, %s184
      %p191 = scmp.eq.s32.totalorder %s27, 1
      %p192 = por %p190, %p191
      %p193 = scmp.ne.s32.totalorder %s184, %s185
      %p194 = scmp.eq.s32.totalorder %s27, 0
      %p195 = por %p193, %p194
      %p196 = scmp.ne.s32.totalorder %s184, %s185
      %p197 = scmp.eq.s32.totalorder %s28, 1
      %p198 = por %p196, %p197
      %p200 = scmp.ne.s32.totalorder %s185, %s199
      %p201 = scmp.eq.s32.totalorder %s28, 0
      %p202 = por %p200, %p201
      %s203 = ssub.s32 %s22, %s29
      %p204 = scmp.eq.s32.totalorder %s203, 0
      %s206 = sadd.s32 %s205, 1
      %s207 = scalar_select %p204, %s205, %s206
      %p210 = pneg %p204
      %p211 = scmp.eq.s32.totalorder %s22, 1
      %p212 = por %p210, %p211
      %p213 = scmp.ne.s32.totalorder %s205, %s208
      %p214 = scmp.eq.s32.totalorder %s22, 0
      %p215 = por %p213, %p214
      %p216 = scmp.ne.s32.totalorder %s205, %s208
      %p217 = scmp.eq.s32.totalorder %s27, 1
      %p218 = por %p216, %p217
      %p219 = scmp.ne.s32.totalorder %s208, %s209
      %p220 = scmp.eq.s32.totalorder %s27, 0
      %p221 = por %p219, %p220
      %p222 = scmp.ne.s32.totalorder %s208, %s209
      %p223 = scmp.eq.s32.totalorder %s28, 1
      %p224 = por %p222, %p223
      %p226 = scmp.ne.s32.totalorder %s209, %s225
      %p227 = scmp.eq.s32.totalorder %s28, 0
      %p228 = por %p226, %p227
      %p229 = scmp.le.s32.totalorder 1, %s22
      %p230 = scmp.lt.s32.totalorder %s22, 3
      %p231 = pnand %p229, %p230
      %p232 = pneg %p231
      // Predicated region
      $region9: #{tpu_custom_call.1} parent=5 // pred_check
        _
      $region10: #{tpu_custom_call.1} parent=5 // pred_check_branch
        %234 = sbr.rel (%p231) target = $region12
      $region11: #{tpu_custom_call.1} parent=5 // pred_region
        %s235 = ssub.s32 %s22, 1
        // Predicated region
        $region13: #{tpu_custom_call.1} parent=11 // pred_check
          %p236 = pneg %p69
        $region14: #{tpu_custom_call.1} parent=11 // pred_check_branch
          %238 = sbr.rel (%p236) target = $region16
        $region15: #{tpu_custom_call.1} parent=11 // pred_region
          %s240 = ssub.s32 1024, 1024
          %241 = vsyncadd [#allocation6], %s240
          %s242 = sshll.u32 [#allocation5], 4
          %s243 = int_to_ptr.vmem [resolvable:$true] %s242
          %248 = dma.hbm_to_vmem [thread:$0]  %s1, 1024, %s243, [#allocation6], 64, 64, 4
        $region16: #{tpu_custom_call.1} parent=11 // pred_fallthru
          _
        // Predicated region
        $region17: #{tpu_custom_call.1} parent=11 // pred_check
          %p249 = pneg %p90
        $region18: #{tpu_custom_call.1} parent=11 // pred_check_branch
          %251 = sbr.rel (%p249) target = $region20
        $region19: #{tpu_custom_call.1} parent=11 // pred_region
          _
        $region20: #{tpu_custom_call.1} parent=11 // pred_fallthru
          _
        // Predicated region
        $region21: #{tpu_custom_call.1} parent=11 // pred_check
          %p252 = pneg %p111
        $region22: #{tpu_custom_call.1} parent=11 // pred_check_branch
          %254 = sbr.rel (%p252) target = $region24
        $region23: #{tpu_custom_call.1} parent=11 // pred_region
          %s256 = ssub.s32 1024, 1024
          %257 = vsyncadd [#allocation6], %s256
          %s258 = sshll.u32 [#allocation7], 4
          %s259 = int_to_ptr.vmem [resolvable:$true] %s258
          %264 = dma.hbm_to_vmem [thread:$0]  %s3, 1024, %s259, [#allocation6], 64, 64, 4
        $region24: #{tpu_custom_call.1} parent=11 // pred_fallthru
          _
        // Predicated region
        $region25: #{tpu_custom_call.1} parent=11 // pred_check
          %p265 = pneg %p132
        $region26: #{tpu_custom_call.1} parent=11 // pred_check_branch
          %267 = sbr.rel (%p265) target = $region28
        $region27: #{tpu_custom_call.1} parent=11 // pred_region
          %s269 = ssub.s32 2048, 2048
          %270 = vsyncadd [#allocation9], %s269
          %s271 = sshll.u32 [#allocation8], 4
          %s272 = int_to_ptr.vmem [resolvable:$true] %s271
          %277 = dma.hbm_to_vmem [thread:$0]  %s4, 2048, %s272, [#allocation9], 128, 128, 8
        $region28: #{tpu_custom_call.1} parent=11 // pred_fallthru
          _
        // Predicated region
        $region29: #{tpu_custom_call.1} parent=11 // pred_check
          %p278 = pneg %p153
        $region30: #{tpu_custom_call.1} parent=11 // pred_check_branch
          %280 = sbr.rel (%p278) target = $region32
        $region31: #{tpu_custom_call.1} parent=11 // pred_region
          _
        $region32: #{tpu_custom_call.1} parent=11 // pred_fallthru
          _
        // Predicated region
        $region33: #{tpu_custom_call.1} parent=11 // pred_check
          %p281 = pneg %p174
        $region34: #{tpu_custom_call.1} parent=11 // pred_check_branch
          %283 = sbr.rel (%p281) target = $region36
        $region35: #{tpu_custom_call.1} parent=11 // pred_region
          %s285 = ssub.s32 2048, 2048
          %286 = vsyncadd [#allocation9], %s285
          %s287 = sshll.u32 [#allocation10], 4
          %s288 = int_to_ptr.vmem [resolvable:$true] %s287
          %293 = dma.hbm_to_vmem [thread:$0]  %s6, 2048, %s288, [#allocation9], 128, 128, 8
        $region36: #{tpu_custom_call.1} parent=11 // pred_fallthru
          _
        // Predicated region
        $region37: #{tpu_custom_call.1} parent=11 // pred_check
          %p294 = pneg %p195
        $region38: #{tpu_custom_call.1} parent=11 // pred_check_branch
          %296 = sbr.rel (%p294) target = $region40
        $region39: #{tpu_custom_call.1} parent=11 // pred_region
          _
        $region40: #{tpu_custom_call.1} parent=11 // pred_fallthru
          _
      $region12: #{tpu_custom_call.1} parent=5 // pred_fallthru
        _
      %p297 = scmp.lt.s32.totalorder %s22, 2
      // Predicated region
      $region41: #{tpu_custom_call.1} parent=5 // pred_check
        %p298 = pneg %p297
      $region42: #{tpu_custom_call.1} parent=5 // pred_check_branch
        %300 = sbr.rel (%p298) target = $region44
      $region43: #{tpu_custom_call.1} parent=5 // pred_region
        // Predicated region
        $region45: #{tpu_custom_call.1} parent=43 // pred_check
          %p301 = pneg %p42
        $region46: #{tpu_custom_call.1} parent=43 // pred_check_branch
          %303 = sbr.rel (%p301) target = $region48
        $region47: #{tpu_custom_call.1} parent=43 // pred_region
          %s304 = sand.u32 %s32, 1
          %s305 = scalar_lea.sflag [#allocation3], %s304
          %s306 = sand.u32 %s32, 1
          %s307 = smul.addr %s306, 64
          %s308 = scalar_lea.vmem [#allocation2], %s307
          %s310 = ssub.s32 1024, 1024
          %311 = vsyncadd %s305, %s310
          %s312 = smul.addr %s22, 16
          %s313 = smul.addr %s312, 64
          %s314 = scalar_lea.hbm %s0, %s313
          %s315 = sshll.u32 %s308, 4
          %s316 = int_to_ptr.vmem [resolvable:$true] %s315
          %321 = dma.hbm_to_vmem [thread:$0]  %s314, 1024, %s316, %s305, 64, 64, 4
        $region48: #{tpu_custom_call.1} parent=43 // pred_fallthru
          _
      $region44: #{tpu_custom_call.1} parent=5 // pred_fallthru
        _
      %p322 = scmp.le.s32.totalorder 1, %s22
      %p323 = scmp.lt.s32.totalorder %s22, 3
      %p324 = pnand %p322, %p323
      %p325 = pneg %p324
      // Predicated region
      $region49: #{tpu_custom_call.1} parent=5 // pred_check
        _
      $region50: #{tpu_custom_call.1} parent=5 // pred_check_branch
        %327 = sbr.rel (%p324) target = $region52
      $region51: #{tpu_custom_call.1} parent=5 // pred_region
        %s328 = ssub.s32 %s22, 1
        %s329 = sand.u32 %s35, 1
        %s330 = scalar_lea.sflag [#allocation3], %s329
        %s331 = sand.u32 %s35, 1
        %s332 = smul.addr %s331, 64
        %s333 = scalar_lea.vmem [#allocation2], %s332
        // Predicated region
        $region53: #{tpu_custom_call.1} parent=51 // pred_check
          %p334 = pneg %p48
        $region54: #{tpu_custom_call.1} parent=51 // pred_check_branch
          %336 = sbr.rel (%p334) target = $region56
        $region55: #{tpu_custom_call.1} parent=51 // pred_region
          %337 = dma.done %s330, 1024
        $region56: #{tpu_custom_call.1} parent=51 // pred_fallthru
          _
        // Predicated region
        $region57: #{tpu_custom_call.1} parent=51 // pred_check
          %p338 = pneg %p69
        $region58: #{tpu_custom_call.1} parent=51 // pred_check_branch
          %340 = sbr.rel (%p338) target = $region60
        $region59: #{tpu_custom_call.1} parent=51 // pred_region
          %341 = dma.done [#allocation6], 1024
        $region60: #{tpu_custom_call.1} parent=51 // pred_fallthru
          _
        // Predicated region
        $region61: #{tpu_custom_call.1} parent=51 // pred_check
          %p342 = pneg %p111
        $region62: #{tpu_custom_call.1} parent=51 // pred_check_branch
          %344 = sbr.rel (%p342) target = $region64
        $region63: #{tpu_custom_call.1} parent=51 // pred_region
          %345 = dma.done [#allocation6], 1024
        $region64: #{tpu_custom_call.1} parent=51 // pred_fallthru
          _
        // Predicated region
        $region65: #{tpu_custom_call.1} parent=51 // pred_check
          %p346 = pneg %p132
        $region66: #{tpu_custom_call.1} parent=51 // pred_check_branch
          %348 = sbr.rel (%p346) target = $region68
        $region67: #{tpu_custom_call.1} parent=51 // pred_region
          %349 = dma.done [#allocation9], 2048
        $region68: #{tpu_custom_call.1} parent=51 // pred_fallthru
          _
        // Predicated region
        $region69: #{tpu_custom_call.1} parent=51 // pred_check
          %p350 = pneg %p174
        $region70: #{tpu_custom_call.1} parent=51 // pred_check_branch
          %352 = sbr.rel (%p350) target = $region72
        $region71: #{tpu_custom_call.1} parent=51 // pred_region
          %353 = dma.done [#allocation9], 2048
        $region72: #{tpu_custom_call.1} parent=51 // pred_fallthru
          _
        %s354 = sand.u32 %s35, 1
        %s355 = scalar_lea.sflag [#allocation3], %s354
        %s356 = sand.u32 %s35, 1
        %s357 = smul.addr %s356, 64
        %s358 = scalar_lea.vmem [#allocation2], %s357
        %p359 = pneg %p48
        %p360 = pneg %p45
        %p361 = pneg %p69
        %p362 = pneg %p66
        %p363 = pneg %p90
        %p364 = pneg %p87
        %p365 = pneg %p111
        %p366 = pneg %p108
        %p367 = pneg %p132
        %p368 = pneg %p129
        %p369 = pneg %p153
        %p370 = pneg %p150
        %p371 = pneg %p174
        %p372 = pneg %p171
        %p373 = pneg %p195
        %p374 = pneg %p192
        %p375 = pneg %p221
        %p376 = pneg %p218
        %s377 = sand.u32 %s208, 1
        %s378 = scalar_lea.sflag [#allocation4], %s377
        %s379 = sand.u32 %s208, 1
        %s380 = smul.addr %s379, 64
        %s381 = scalar_lea.vmem [#allocation11], %s380
        %v383 = vld [vmem:[%s333] sm:$0xf]
        %v384 = vld [vmem:[%s333 + $0x4] sm:$0xf]
        %v385 = vld [vmem:[%s333 + $0x8] sm:$0xf]
        %v386 = vld [vmem:[%s333 + $0xc] sm:$0xf]
        %v387 = vld [vmem:[%s333 + $0x10] sm:$0xf]
        %v388 = vld [vmem:[%s333 + $0x14] sm:$0xf]
        %v389 = vld [vmem:[%s333 + $0x18] sm:$0xf]
        %v390 = vld [vmem:[%s333 + $0x1c] sm:$0xf]
        %v391 = vld [vmem:[%s333 + $0x20] sm:$0xf]
        %v392 = vld [vmem:[%s333 + $0x24] sm:$0xf]
        %v393 = vld [vmem:[%s333 + $0x28] sm:$0xf]
        %v394 = vld [vmem:[%s333 + $0x2c] sm:$0xf]
        %v395 = vld [vmem:[%s333 + $0x30] sm:$0xf]
        %v396 = vld [vmem:[%s333 + $0x34] sm:$0xf]
        %v397 = vld [vmem:[%s333 + $0x38] sm:$0xf]
        %v398 = vld [vmem:[%s333 + $0x3c] sm:$0xf]
        %v399 = vunpack.c.l.bf16 %v383
        %v400 = vunpack.c.l.bf16 %v384
        %v401 = vunpack.c.l.bf16 %v385
        %v402 = vunpack.c.l.bf16 %v386
        %v403 = vunpack.c.l.bf16 %v387
        %v404 = vunpack.c.l.bf16 %v388
        %v405 = vunpack.c.l.bf16 %v389
        %v406 = vunpack.c.l.bf16 %v390
        %v407 = vunpack.c.l.bf16 %v391
        %v408 = vunpack.c.l.bf16 %v392
        %v409 = vunpack.c.l.bf16 %v393
        %v410 = vunpack.c.l.bf16 %v394
        %v411 = vunpack.c.l.bf16 %v395
        %v412 = vunpack.c.l.bf16 %v396
        %v413 = vunpack.c.l.bf16 %v397
        %v414 = vunpack.c.l.bf16 %v398
        %v415 = vadd.f32 %v399, %v400
        %v416 = vadd.f32 %v415, %v401
        %v417 = vadd.f32 %v416, %v402
        %v418 = vadd.f32 %v417, %v403
        %v419 = vadd.f32 %v418, %v404
        %v420 = vadd.f32 %v419, %v405
        %v421 = vadd.f32 %v420, %v406
        %v422 = vadd.f32 %v421, %v407
        %v423 = vadd.f32 %v422, %v408
        %v424 = vadd.f32 %v423, %v409
        %v425 = vadd.f32 %v424, %v410
        %v426 = vadd.f32 %v425, %v411
        %v427 = vadd.f32 %v426, %v412
        %v428 = vadd.f32 %v427, %v413
        %v429 = vadd.f32 %v428, %v414
        %v430 = vrot.slane %v429, 4
        %v431 = vadd.f32 %v429, %v430
        %v432 = vrot.slane %v431, 2
        %v433 = vadd.f32 %v431, %v432
        %v434 = vrot.slane %v433, 1
        %v435 = vadd.f32 %v433, %v434
        %v436 = vmul.f32 %v435, 0.00390625
        %v437 = vld [vmem:[#allocation8] sm:$0xff]
        %v438 = vld [vmem:[#allocation8 + $0x8] sm:$0xff]
        %v439 = vld [vmem:[#allocation8 + $0x10] sm:$0xff]
        %v440 = vld [vmem:[#allocation8 + $0x18] sm:$0xff]
        %v441 = vld [vmem:[#allocation8 + $0x20] sm:$0xff]
        %v442 = vld [vmem:[#allocation8 + $0x28] sm:$0xff]
        %v443 = vld [vmem:[#allocation8 + $0x30] sm:$0xff]
        %v444 = vld [vmem:[#allocation8 + $0x38] sm:$0xff]
        %v445 = vld [vmem:[#allocation8 + $0x40] sm:$0xff]
        %v446 = vld [vmem:[#allocation8 + $0x48] sm:$0xff]
        %v447 = vld [vmem:[#allocation8 + $0x50] sm:$0xff]
        %v448 = vld [vmem:[#allocation8 + $0x58] sm:$0xff]
        %v449 = vld [vmem:[#allocation8 + $0x60] sm:$0xff]
        %v450 = vld [vmem:[#allocation8 + $0x68] sm:$0xff]
        %v451 = vld [vmem:[#allocation8 + $0x70] sm:$0xff]
        %v452 = vld [vmem:[#allocation8 + $0x78] sm:$0xff]
        %v453 = vld [vmem:[%s5] sm:$0x1]
        %454 = vmatprep.subr.mxu0 0.0
        %455 = vmatpush1.msra.mxu0 %v452
        %456 = vmatprep.subr.mxu0 0.0
        %457 = vmatpush1.msra.mxu0 %v451
        %458 = vmatprep.subr.mxu0 0.0
        %459 = vmatpush1.msra.mxu0 %v450
        %460 = vmatprep.subr.mxu0 0.0
        %461 = vmatpush1.msra.mxu0 %v449
        %462 = vmatprep.subr.mxu0 0.0
        %463 = vmatpush1.msra.mxu0 %v448
        %464 = vmatprep.subr.mxu0 0.0
        %465 = vmatpush1.msra.mxu0 %v447
        %466 = vmatprep.subr.mxu0 0.0
        %467 = vmatpush1.msra.mxu0 %v446
        %468 = vmatprep.subr.mxu0 0.0
        %469 = vmatpush1.msra.mxu0 %v445
        %470 = vmatprep.subr.mxu0 0.0
        %471 = vmatpush1.msra.mxu0 %v444
        %472 = vmatprep.subr.mxu0 0.0
        %473 = vmatpush1.msra.mxu0 %v443
        %474 = vmatprep.subr.mxu0 0.0
        %475 = vmatpush1.msra.mxu0 %v442
        %476 = vmatprep.subr.mxu0 0.0
        %477 = vmatpush1.msra.mxu0 %v441
        %478 = vmatprep.subr.mxu0 0.0
        %479 = vmatpush1.msra.mxu0 %v440
        %480 = vmatprep.subr.mxu0 0.0
        %481 = vmatpush1.msra.mxu0 %v439
        %482 = vmatprep.subr.mxu0 0.0
        %483 = vmatpush1.msra.mxu0 %v438
        %484 = vmatprep.subr.mxu0 0.0
        %485 = vmatpush1.msra.mxu0 %v437
        %486 = vmatprep.subr.mxu0 0.0
        %487 = vmatpush2.msra.mxu0 0.0
        %488 = vmatprep.subr.mxu0 0.0
        %489 = vmatpush2.msra.mxu0 0.0
        %490 = vmatprep.subr.mxu0 0.0
        %491 = vmatpush2.msra.mxu0 0.0
        %492 = vmatprep.subr.mxu0 0.0
        %493 = vmatpush2.msra.mxu0 0.0
        %494 = vmatprep.subr.mxu0 0.0
        %495 = vmatpush2.msra.mxu0 0.0
        %496 = vmatprep.subr.mxu0 0.0
        %497 = vmatpush2.msra.mxu0 0.0
        %498 = vmatprep.subr.mxu0 0.0
        %499 = vmatpush2.msra.mxu0 0.0
        %500 = vmatprep.subr.mxu0 0.0
        %501 = vmatpush2.msra.mxu0 0.0
        %502 = vmatprep.subr.mxu0 0.0
        %503 = vmatpush2.msra.mxu0 0.0
        %504 = vmatprep.subr.mxu0 0.0
        %505 = vmatpush2.msra.mxu0 0.0
        %506 = vmatprep.subr.mxu0 0.0
        %507 = vmatpush2.msra.mxu0 0.0
        %508 = vmatprep.subr.mxu0 0.0
        %509 = vmatpush2.msra.mxu0 0.0
        %510 = vmatprep.subr.mxu0 0.0
        %511 = vmatpush2.msra.mxu0 0.0
        %512 = vmatprep.subr.mxu0 0.0
        %513 = vmatpush2.msra.mxu0 0.0
        %514 = vmatprep.subr.mxu0 0.0
        %515 = vmatpush2.msra.mxu0 0.0
        %516 = vmatprep.subr.mxu0 0.0
        %517 = vmatpush2.msra.mxu0 0.0
        %518 = vmatprep.mubr.f32.mxu0 0.0
        %519 = vmatmul.mubr.f32.gmra.mxu0 %v436
        %v520 = vpop.f32.mrf.mxu0
        %v521 = vadd.f32 %v453, %v520
        %v522 = vpop.f32.mrf.mxu0
        %523 = vdwg.mxu0
        %v524 = vmax.f32 %v521, 0.0
        %v525 = vld [vmem:[#allocation10] sm:$0xff]
        %v526 = vld [vmem:[#allocation10 + $0x8] sm:$0xff]
        %v527 = vld [vmem:[#allocation10 + $0x10] sm:$0xff]
        %v528 = vld [vmem:[#allocation10 + $0x18] sm:$0xff]
        %v529 = vld [vmem:[#allocation10 + $0x20] sm:$0xff]
        %v530 = vld [vmem:[#allocation10 + $0x28] sm:$0xff]
        %v531 = vld [vmem:[#allocation10 + $0x30] sm:$0xff]
        %v532 = vld [vmem:[#allocation10 + $0x38] sm:$0xff]
        %v533 = vld [vmem:[#allocation10 + $0x40] sm:$0xff]
        %v534 = vld [vmem:[#allocation10 + $0x48] sm:$0xff]
        %v535 = vld [vmem:[#allocation10 + $0x50] sm:$0xff]
        %v536 = vld [vmem:[#allocation10 + $0x58] sm:$0xff]
        %v537 = vld [vmem:[#allocation10 + $0x60] sm:$0xff]
        %v538 = vld [vmem:[#allocation10 + $0x68] sm:$0xff]
        %v539 = vld [vmem:[#allocation10 + $0x70] sm:$0xff]
        %v540 = vld [vmem:[#allocation10 + $0x78] sm:$0xff]
        %v541 = vld [vmem:[%s7] sm:$0x1]
        %542 = vmatprep.subr.mxu0 0.0
        %543 = vmatpush1.msra.mxu0 %v540
        %544 = vmatprep.subr.mxu0 0.0
        %545 = vmatpush1.msra.mxu0 %v539
        %546 = vmatprep.subr.mxu0 0.0
        %547 = vmatpush1.msra.mxu0 %v538
        %548 = vmatprep.subr.mxu0 0.0
        %549 = vmatpush1.msra.mxu0 %v537
        %550 = vmatprep.subr.mxu0 0.0
        %551 = vmatpush1.msra.mxu0 %v536
        %552 = vmatprep.subr.mxu0 0.0
        %553 = vmatpush1.msra.mxu0 %v535
        %554 = vmatprep.subr.mxu0 0.0
        %555 = vmatpush1.msra.mxu0 %v534
        %556 = vmatprep.subr.mxu0 0.0
        %557 = vmatpush1.msra.mxu0 %v533
        %558 = vmatprep.subr.mxu0 0.0
        %559 = vmatpush1.msra.mxu0 %v532
        %560 = vmatprep.subr.mxu0 0.0
        %561 = vmatpush1.msra.mxu0 %v531
        %562 = vmatprep.subr.mxu0 0.0
        %563 = vmatpush1.msra.mxu0 %v530
        %564 = vmatprep.subr.mxu0 0.0
        %565 = vmatpush1.msra.mxu0 %v529
        %566 = vmatprep.subr.mxu0 0.0
        %567 = vmatpush1.msra.mxu0 %v528
        %568 = vmatprep.subr.mxu0 0.0
        %569 = vmatpush1.msra.mxu0 %v527
        %570 = vmatprep.subr.mxu0 0.0
        %571 = vmatpush1.msra.mxu0 %v526
        %572 = vmatprep.subr.mxu0 0.0
        %573 = vmatpush1.msra.mxu0 %v525
        %574 = vmatprep.subr.mxu0 0.0
        %575 = vmatpush2.msra.mxu0 0.0
        %576 = vmatprep.subr.mxu0 0.0
        %577 = vmatpush2.msra.mxu0 0.0
        %578 = vmatprep.subr.mxu0 0.0
        %579 = vmatpush2.msra.mxu0 0.0
        %580 = vmatprep.subr.mxu0 0.0
        %581 = vmatpush2.msra.mxu0 0.0
        %582 = vmatprep.subr.mxu0 0.0
        %583 = vmatpush2.msra.mxu0 0.0
        %584 = vmatprep.subr.mxu0 0.0
        %585 = vmatpush2.msra.mxu0 0.0
        %586 = vmatprep.subr.mxu0 0.0
        %587 = vmatpush2.msra.mxu0 0.0
        %588 = vmatprep.subr.mxu0 0.0
        %589 = vmatpush2.msra.mxu0 0.0
        %590 = vmatprep.subr.mxu0 0.0
        %591 = vmatpush2.msra.mxu0 0.0
        %592 = vmatprep.subr.mxu0 0.0
        %593 = vmatpush2.msra.mxu0 0.0
        %594 = vmatprep.subr.mxu0 0.0
        %595 = vmatpush2.msra.mxu0 0.0
        %596 = vmatprep.subr.mxu0 0.0
        %597 = vmatpush2.msra.mxu0 0.0
        %598 = vmatprep.subr.mxu0 0.0
        %599 = vmatpush2.msra.mxu0 0.0
        %600 = vmatprep.subr.mxu0 0.0
        %601 = vmatpush2.msra.mxu0 0.0
        %602 = vmatprep.subr.mxu0 0.0
        %603 = vmatpush2.msra.mxu0 0.0
        %604 = vmatprep.subr.mxu0 0.0
        %605 = vmatpush2.msra.mxu0 0.0
        %606 = vmatprep.mubr.f32.mxu0 0.0
        %607 = vmatmul.mubr.f32.gmra.mxu0 %v524
        %v608 = vpop.f32.mrf.mxu0
        %v609 = vadd.f32 %v541, %v608
        %v610 = vpop.f32.mrf.mxu0
        %611 = vdwg.mxu0
        %v612 = vld [vmem:[#allocation5] sm:$0xf]
        %v613 = vld [vmem:[#allocation5 + $0x4] sm:$0xf]
        %v614 = vld [vmem:[#allocation5 + $0x8] sm:$0xf]
        %v615 = vld [vmem:[#allocation5 + $0xc] sm:$0xf]
        %v616 = vld [vmem:[#allocation5 + $0x10] sm:$0xf]
        %v617 = vld [vmem:[#allocation5 + $0x14] sm:$0xf]
        %v618 = vld [vmem:[#allocation5 + $0x18] sm:$0xf]
        %v619 = vld [vmem:[#allocation5 + $0x1c] sm:$0xf]
        %v620 = vld [vmem:[#allocation5 + $0x20] sm:$0xf]
        %v621 = vld [vmem:[#allocation5 + $0x24] sm:$0xf]
        %v622 = vld [vmem:[#allocation5 + $0x28] sm:$0xf]
        %v623 = vld [vmem:[#allocation5 + $0x2c] sm:$0xf]
        %v624 = vld [vmem:[#allocation5 + $0x30] sm:$0xf]
        %v625 = vld [vmem:[#allocation5 + $0x34] sm:$0xf]
        %v626 = vld [vmem:[#allocation5 + $0x38] sm:$0xf]
        %v627 = vld [vmem:[#allocation5 + $0x3c] sm:$0xf]
        %v628 = vld [vmem:[%s2] sm:$0x1]
        %v630 = vlaneseq
        %v631 = vshrl.u32 %v630, 7
        %v632 = vsub.s32 0, %v631
        %v633 = vrot.slane %v628, %v632
        %v651 = vunpack.c.l.b16 %v383
        %v652 = vunpack.c.l.b16 %v384
        %v653 = vunpack.c.l.b16 %v385
        %v654 = vunpack.c.l.b16 %v386
        %v655 = vunpack.c.l.b16 %v387
        %v656 = vunpack.c.l.b16 %v388
        %v657 = vunpack.c.l.b16 %v389
        %v658 = vunpack.c.l.b16 %v390
        %v659 = vunpack.c.l.b16 %v391
        %v660 = vunpack.c.l.b16 %v392
        %v661 = vunpack.c.l.b16 %v393
        %v662 = vunpack.c.l.b16 %v394
        %v663 = vunpack.c.l.b16 %v395
        %v664 = vunpack.c.l.b16 %v396
        %v665 = vunpack.c.l.b16 %v397
        %v666 = vunpack.c.l.b16 %v398
        %v667 = vpack.c.b16 %v652, %v651
        %v668 = vpack.c.b16 %v654, %v653
        %v669 = vpack.c.b16 %v656, %v655
        %v670 = vpack.c.b16 %v658, %v657
        %v671 = vpack.c.b16 %v660, %v659
        %v672 = vpack.c.b16 %v662, %v661
        %v673 = vpack.c.b16 %v664, %v663
        %v674 = vpack.c.b16 %v666, %v665
        %v699 = vunpack.c.l.b16 %v612
        %v700 = vunpack.c.l.b16 %v613
        %v701 = vunpack.c.l.b16 %v614
        %v702 = vunpack.c.l.b16 %v615
        %v703 = vunpack.c.l.b16 %v616
        %v704 = vunpack.c.l.b16 %v617
        %v705 = vunpack.c.l.b16 %v618
        %v706 = vunpack.c.l.b16 %v619
        %v707 = vunpack.c.l.b16 %v620
        %v708 = vunpack.c.l.b16 %v621
        %v709 = vunpack.c.l.b16 %v622
        %v710 = vunpack.c.l.b16 %v623
        %v711 = vunpack.c.l.b16 %v624
        %v712 = vunpack.c.l.b16 %v625
        %v713 = vunpack.c.l.b16 %v626
        %v714 = vunpack.c.l.b16 %v627
        %v715 = vpack.c.b16 %v700, %v699
        %v716 = vpack.c.b16 %v702, %v701
        %v717 = vpack.c.b16 %v704, %v703
        %v718 = vpack.c.b16 %v706, %v705
        %v719 = vpack.c.b16 %v708, %v707
        %v720 = vpack.c.b16 %v710, %v709
        %v721 = vpack.c.b16 %v712, %v711
        %v722 = vpack.c.b16 %v714, %v713
        %731 = vmatprep.subr.bf16.mxu0 0
        %732 = vmatpush1.bf16.msra.mxu0 %v722
        %733 = vmatprep.subr.bf16.mxu0 0
        %734 = vmatpush1.bf16.msra.mxu0 %v721
        %735 = vmatprep.subr.bf16.mxu0 0
        %736 = vmatpush1.bf16.msra.mxu0 %v720
        %737 = vmatprep.subr.bf16.mxu0 0
        %738 = vmatpush1.bf16.msra.mxu0 %v719
        %739 = vmatprep.subr.bf16.mxu0 0
        %740 = vmatpush1.bf16.msra.mxu0 %v718
        %741 = vmatprep.subr.bf16.mxu0 0
        %742 = vmatpush1.bf16.msra.mxu0 %v717
        %743 = vmatprep.subr.bf16.mxu0 0
        %744 = vmatpush1.bf16.msra.mxu0 %v716
        %745 = vmatprep.subr.bf16.mxu0 0
        %746 = vmatpush1.bf16.msra.mxu0 %v715
        %747 = vmatprep.subr.bf16.mxu0 0
        %748 = vmatpush2.bf16.msra.mxu0 0
        %749 = vmatprep.subr.bf16.mxu0 0
        %750 = vmatpush2.bf16.msra.mxu0 0
        %751 = vmatprep.subr.bf16.mxu0 0
        %752 = vmatpush2.bf16.msra.mxu0 0
        %753 = vmatprep.subr.bf16.mxu0 0
        %754 = vmatpush2.bf16.msra.mxu0 0
        %755 = vmatprep.subr.bf16.mxu0 0
        %756 = vmatpush2.bf16.msra.mxu0 0
        %757 = vmatprep.subr.bf16.mxu0 0
        %758 = vmatpush2.bf16.msra.mxu0 0
        %759 = vmatprep.subr.bf16.mxu0 0
        %760 = vmatpush2.bf16.msra.mxu0 0
        %761 = vmatprep.subr.bf16.mxu0 0
        %762 = vmatpush2.bf16.msra.mxu0 0
        %763 = vmatprep.mubr.bf16.mxu0 0
        %764 = vmatmul.mubr.bf16.gmra.mxu0 %v667
        %v765 = vpop.f32.mrf.mxu0
        %v766 = vadd.f32 %v633, %v765
        %v767 = vpop.f32.mrf.mxu0
        %v768 = vpop.f32.mrf.mxu0
        %v769 = vadd.f32 %v633, %v768
        %v770 = vpop.f32.mrf.mxu0
        %771 = vmatprep.mubr.bf16.mxu0 0
        %772 = vmatmul.mubr.bf16.gmra.mxu0 %v668
        %v773 = vpop.f32.mrf.mxu0
        %v774 = vadd.f32 %v633, %v773
        %v775 = vpop.f32.mrf.mxu0
        %v776 = vpop.f32.mrf.mxu0
        %v777 = vadd.f32 %v633, %v776
        %v778 = vpop.f32.mrf.mxu0
        %779 = vmatprep.mubr.bf16.mxu0 0
        %780 = vmatmul.mubr.bf16.gmra.mxu0 %v669
        %v781 = vpop.f32.mrf.mxu0
        %v782 = vadd.f32 %v633, %v781
        %v783 = vpop.f32.mrf.mxu0
        %v784 = vpop.f32.mrf.mxu0
        %v785 = vadd.f32 %v633, %v784
        %v786 = vpop.f32.mrf.mxu0
        %787 = vmatprep.mubr.bf16.mxu0 0
        %788 = vmatmul.mubr.bf16.gmra.mxu0 %v670
        %v789 = vpop.f32.mrf.mxu0
        %v790 = vadd.f32 %v633, %v789
        %v791 = vpop.f32.mrf.mxu0
        %v792 = vpop.f32.mrf.mxu0
        %v793 = vadd.f32 %v633, %v792
        %v794 = vpop.f32.mrf.mxu0
        %795 = vmatprep.mubr.bf16.mxu0 0
        %796 = vmatmul.mubr.bf16.gmra.mxu0 %v671
        %v797 = vpop.f32.mrf.mxu0
        %v798 = vadd.f32 %v633, %v797
        %v799 = vpop.f32.mrf.mxu0
        %v800 = vpop.f32.mrf.mxu0
        %v801 = vadd.f32 %v633, %v800
        %v802 = vpop.f32.mrf.mxu0
        %803 = vmatprep.mubr.bf16.mxu0 0
        %804 = vmatmul.mubr.bf16.gmra.mxu0 %v672
        %v805 = vpop.f32.mrf.mxu0
        %v806 = vadd.f32 %v633, %v805
        %v807 = vpop.f32.mrf.mxu0
        %v808 = vpop.f32.mrf.mxu0
        %v809 = vadd.f32 %v633, %v808
        %v810 = vpop.f32.mrf.mxu0
        %811 = vmatprep.mubr.bf16.mxu0 0
        %812 = vmatmul.mubr.bf16.gmra.mxu0 %v673
        %v813 = vpop.f32.mrf.mxu0
        %v814 = vadd.f32 %v633, %v813
        %v815 = vpop.f32.mrf.mxu0
        %v816 = vpop.f32.mrf.mxu0
        %v817 = vadd.f32 %v633, %v816
        %v818 = vpop.f32.mrf.mxu0
        %819 = vmatprep.mubr.bf16.mxu0 0
        %820 = vmatmul.mubr.bf16.gmra.mxu0 %v674
        %v821 = vpop.f32.mrf.mxu0
        %v822 = vadd.f32 %v633, %v821
        %v823 = vpop.f32.mrf.mxu0
        %v824 = vpop.f32.mrf.mxu0
        %v825 = vadd.f32 %v633, %v824
        %v826 = vpop.f32.mrf.mxu0
        %827 = vdwg.mxu0
        %v828 = vmax.f32 %v766, 0.0
        %v829 = vmax.f32 %v769, 0.0
        %v830 = vmax.f32 %v774, 0.0
        %v831 = vmax.f32 %v777, 0.0
        %v832 = vmax.f32 %v782, 0.0
        %v833 = vmax.f32 %v785, 0.0
        %v834 = vmax.f32 %v790, 0.0
        %v835 = vmax.f32 %v793, 0.0
        %v836 = vmax.f32 %v798, 0.0
        %v837 = vmax.f32 %v801, 0.0
        %v838 = vmax.f32 %v806, 0.0
        %v839 = vmax.f32 %v809, 0.0
        %v840 = vmax.f32 %v814, 0.0
        %v841 = vmax.f32 %v817, 0.0
        %v842 = vmax.f32 %v822, 0.0
        %v843 = vmax.f32 %v825, 0.0
        %v844 = vpack.c.bf16 %v829, %v828
        %v845 = vpack.c.bf16 %v831, %v830
        %v846 = vpack.c.bf16 %v833, %v832
        %v847 = vpack.c.bf16 %v835, %v834
        %v848 = vpack.c.bf16 %v837, %v836
        %v849 = vpack.c.bf16 %v839, %v838
        %v850 = vpack.c.bf16 %v841, %v840
        %v851 = vpack.c.bf16 %v843, %v842
        %v852 = vld [vmem:[#allocation7] sm:$0xf]
        %v853 = vld [vmem:[#allocation7 + $0x4] sm:$0xf]
        %v854 = vld [vmem:[#allocation7 + $0x8] sm:$0xf]
        %v855 = vld [vmem:[#allocation7 + $0xc] sm:$0xf]
        %v856 = vld [vmem:[#allocation7 + $0x10] sm:$0xf]
        %v857 = vld [vmem:[#allocation7 + $0x14] sm:$0xf]
        %v858 = vld [vmem:[#allocation7 + $0x18] sm:$0xf]
        %v859 = vld [vmem:[#allocation7 + $0x1c] sm:$0xf]
        %v860 = vld [vmem:[#allocation7 + $0x20] sm:$0xf]
        %v861 = vld [vmem:[#allocation7 + $0x24] sm:$0xf]
        %v862 = vld [vmem:[#allocation7 + $0x28] sm:$0xf]
        %v863 = vld [vmem:[#allocation7 + $0x2c] sm:$0xf]
        %v864 = vld [vmem:[#allocation7 + $0x30] sm:$0xf]
        %v865 = vld [vmem:[#allocation7 + $0x34] sm:$0xf]
        %v866 = vld [vmem:[#allocation7 + $0x38] sm:$0xf]
        %v867 = vld [vmem:[#allocation7 + $0x3c] sm:$0xf]
        %v868 = vlaneseq
        %v869 = vshrl.u32 %v868, 7
        %v870 = vsub.s32 0, %v869
        %v871 = vrot.slane %v609, %v870
        %v888 = vunpack.c.l.b16 %v852
        %v889 = vunpack.c.l.b16 %v853
        %v890 = vunpack.c.l.b16 %v854
        %v891 = vunpack.c.l.b16 %v855
        %v892 = vunpack.c.l.b16 %v856
        %v893 = vunpack.c.l.b16 %v857
        %v894 = vunpack.c.l.b16 %v858
        %v895 = vunpack.c.l.b16 %v859
        %v896 = vunpack.c.l.b16 %v860
        %v897 = vunpack.c.l.b16 %v861
        %v898 = vunpack.c.l.b16 %v862
        %v899 = vunpack.c.l.b16 %v863
        %v900 = vunpack.c.l.b16 %v864
        %v901 = vunpack.c.l.b16 %v865
        %v902 = vunpack.c.l.b16 %v866
        %v903 = vunpack.c.l.b16 %v867
        %v904 = vpack.c.b16 %v889, %v888
        %v905 = vpack.c.b16 %v891, %v890
        %v906 = vpack.c.b16 %v893, %v892
        %v907 = vpack.c.b16 %v895, %v894
        %v908 = vpack.c.b16 %v897, %v896
        %v909 = vpack.c.b16 %v899, %v898
        %v910 = vpack.c.b16 %v901, %v900
        %v911 = vpack.c.b16 %v903, %v902
        %920 = vmatprep.subr.bf16.mxu0 0
        %921 = vmatpush1.bf16.msra.mxu0 %v911
        %922 = vmatprep.subr.bf16.mxu0 0
        %923 = vmatpush1.bf16.msra.mxu0 %v910
        %924 = vmatprep.subr.bf16.mxu0 0
        %925 = vmatpush1.bf16.msra.mxu0 %v909
        %926 = vmatprep.subr.bf16.mxu0 0
        %927 = vmatpush1.bf16.msra.mxu0 %v908
        %928 = vmatprep.subr.bf16.mxu0 0
        %929 = vmatpush1.bf16.msra.mxu0 %v907
        %930 = vmatprep.subr.bf16.mxu0 0
        %931 = vmatpush1.bf16.msra.mxu0 %v906
        %932 = vmatprep.subr.bf16.mxu0 0
        %933 = vmatpush1.bf16.msra.mxu0 %v905
        %934 = vmatprep.subr.bf16.mxu0 0
        %935 = vmatpush1.bf16.msra.mxu0 %v904
        %936 = vmatprep.subr.bf16.mxu0 0
        %937 = vmatpush2.bf16.msra.mxu0 0
        %938 = vmatprep.subr.bf16.mxu0 0
        %939 = vmatpush2.bf16.msra.mxu0 0
        %940 = vmatprep.subr.bf16.mxu0 0
        %941 = vmatpush2.bf16.msra.mxu0 0
        %942 = vmatprep.subr.bf16.mxu0 0
        %943 = vmatpush2.bf16.msra.mxu0 0
        %944 = vmatprep.subr.bf16.mxu0 0
        %945 = vmatpush2.bf16.msra.mxu0 0
        %946 = vmatprep.subr.bf16.mxu0 0
        %947 = vmatpush2.bf16.msra.mxu0 0
        %948 = vmatprep.subr.bf16.mxu0 0
        %949 = vmatpush2.bf16.msra.mxu0 0
        %950 = vmatprep.subr.bf16.mxu0 0
        %951 = vmatpush2.bf16.msra.mxu0 0
        %952 = vmatprep.mubr.bf16.mxu0 0
        %953 = vmatmul.mubr.bf16.gmra.mxu0 %v844
        %v954 = vpop.f32.mrf.mxu0
        %v955 = vadd.f32 %v871, %v954
        %v956 = vpop.f32.mrf.mxu0
        %v957 = vpop.f32.mrf.mxu0
        %v958 = vadd.f32 %v871, %v957
        %v959 = vpop.f32.mrf.mxu0
        %960 = vmatprep.mubr.bf16.mxu0 0
        %961 = vmatmul.mubr.bf16.gmra.mxu0 %v845
        %v962 = vpop.f32.mrf.mxu0
        %v963 = vadd.f32 %v871, %v962
        %v964 = vpop.f32.mrf.mxu0
        %v965 = vpop.f32.mrf.mxu0
        %v966 = vadd.f32 %v871, %v965
        %v967 = vpop.f32.mrf.mxu0
        %968 = vmatprep.mubr.bf16.mxu0 0
        %969 = vmatmul.mubr.bf16.gmra.mxu0 %v846
        %v970 = vpop.f32.mrf.mxu0
        %v971 = vadd.f32 %v871, %v970
        %v972 = vpop.f32.mrf.mxu0
        %v973 = vpop.f32.mrf.mxu0
        %v974 = vadd.f32 %v871, %v973
        %v975 = vpop.f32.mrf.mxu0
        %976 = vmatprep.mubr.bf16.mxu0 0
        %977 = vmatmul.mubr.bf16.gmra.mxu0 %v847
        %v978 = vpop.f32.mrf.mxu0
        %v979 = vadd.f32 %v871, %v978
        %v980 = vpop.f32.mrf.mxu0
        %v981 = vpop.f32.mrf.mxu0
        %v982 = vadd.f32 %v871, %v981
        %v983 = vpop.f32.mrf.mxu0
        %984 = vmatprep.mubr.bf16.mxu0 0
        %985 = vmatmul.mubr.bf16.gmra.mxu0 %v848
        %v986 = vpop.f32.mrf.mxu0
        %v987 = vadd.f32 %v871, %v986
        %v988 = vpop.f32.mrf.mxu0
        %v989 = vpop.f32.mrf.mxu0
        %v990 = vadd.f32 %v871, %v989
        %v991 = vpop.f32.mrf.mxu0
        %992 = vmatprep.mubr.bf16.mxu0 0
        %993 = vmatmul.mubr.bf16.gmra.mxu0 %v849
        %v994 = vpop.f32.mrf.mxu0
        %v995 = vadd.f32 %v871, %v994
        %v996 = vpop.f32.mrf.mxu0
        %v997 = vpop.f32.mrf.mxu0
        %v998 = vadd.f32 %v871, %v997
        %v999 = vpop.f32.mrf.mxu0
        %1000 = vmatprep.mubr.bf16.mxu0 0
        %1001 = vmatmul.mubr.bf16.gmra.mxu0 %v850
        %v1002 = vpop.f32.mrf.mxu0
        %v1003 = vadd.f32 %v871, %v1002
        %v1004 = vpop.f32.mrf.mxu0
        %v1005 = vpop.f32.mrf.mxu0
        %v1006 = vadd.f32 %v871, %v1005
        %v1007 = vpop.f32.mrf.mxu0
        %1008 = vmatprep.mubr.bf16.mxu0 0
        %1009 = vmatmul.mubr.bf16.gmra.mxu0 %v851
        %v1010 = vpop.f32.mrf.mxu0
        %v1011 = vadd.f32 %v871, %v1010
        %v1012 = vpop.f32.mrf.mxu0
        %v1013 = vpop.f32.mrf.mxu0
        %v1014 = vadd.f32 %v871, %v1013
        %v1015 = vpop.f32.mrf.mxu0
        %1016 = vdwg.mxu0
        %v1017 = vsub.f32 0.0, %v955
        %v1018 = vsub.f32 0.0, %v958
        %v1019 = vsub.f32 0.0, %v963
        %v1020 = vsub.f32 0.0, %v966
        %v1021 = vsub.f32 0.0, %v971
        %v1022 = vsub.f32 0.0, %v974
        %v1023 = vsub.f32 0.0, %v979
        %v1024 = vsub.f32 0.0, %v982
        %v1025 = vsub.f32 0.0, %v987
        %v1026 = vsub.f32 0.0, %v990
        %v1027 = vsub.f32 0.0, %v995
        %v1028 = vsub.f32 0.0, %v998
        %v1029 = vsub.f32 0.0, %v1003
        %v1030 = vsub.f32 0.0, %v1006
        %v1031 = vsub.f32 0.0, %v1011
        %v1032 = vsub.f32 0.0, %v1014
        %v1033 = vmul.f32 %v1017, 1.442695
        %v1034 = vpow.pop %v1033
        %v1035 = vmul.f32 %v1018, 1.442695
        %v1036 = vpow.pop %v1035
        %v1037 = vmul.f32 %v1019, 1.442695
        %v1038 = vpow.pop %v1037
        %v1039 = vmul.f32 %v1020, 1.442695
        %v1040 = vpow.pop %v1039
        %v1041 = vmul.f32 %v1021, 1.442695
        %v1042 = vpow.pop %v1041
        %v1043 = vmul.f32 %v1022, 1.442695
        %v1044 = vpow.pop %v1043
        %v1045 = vmul.f32 %v1023, 1.442695
        %v1046 = vpow.pop %v1045
        %v1047 = vmul.f32 %v1024, 1.442695
        %v1048 = vpow.pop %v1047
        %v1049 = vmul.f32 %v1025, 1.442695
        %v1050 = vpow.pop %v1049
        %v1051 = vmul.f32 %v1026, 1.442695
        %v1052 = vpow.pop %v1051
        %v1053 = vmul.f32 %v1027, 1.442695
        %v1054 = vpow.pop %v1053
        %v1055 = vmul.f32 %v1028, 1.442695
        %v1056 = vpow.pop %v1055
        %v1057 = vmul.f32 %v1029, 1.442695
        %v1058 = vpow.pop %v1057
        %v1059 = vmul.f32 %v1030, 1.442695
        %v1060 = vpow.pop %v1059
        %v1061 = vmul.f32 %v1031, 1.442695
        %v1062 = vpow.pop %v1061
        %v1063 = vmul.f32 %v1032, 1.442695
        %v1064 = vpow.pop %v1063
        %v1065 = vadd.f32 %v1034, 1.0
        %v1066 = vadd.f32 %v1036, 1.0
        %v1067 = vadd.f32 %v1038, 1.0
        %v1068 = vadd.f32 %v1040, 1.0
        %v1069 = vadd.f32 %v1042, 1.0
        %v1070 = vadd.f32 %v1044, 1.0
        %v1071 = vadd.f32 %v1046, 1.0
        %v1072 = vadd.f32 %v1048, 1.0
        %v1073 = vadd.f32 %v1050, 1.0
        %v1074 = vadd.f32 %v1052, 1.0
        %v1075 = vadd.f32 %v1054, 1.0
        %v1076 = vadd.f32 %v1056, 1.0
        %v1077 = vadd.f32 %v1058, 1.0
        %v1078 = vadd.f32 %v1060, 1.0
        %v1079 = vadd.f32 %v1062, 1.0
        %v1080 = vadd.f32 %v1064, 1.0
        %v1081 = vrcp.pop %v1065
        %v1082 = vrcp.pop %v1066
        %v1083 = vrcp.pop %v1067
        %v1084 = vrcp.pop %v1068
        %v1085 = vrcp.pop %v1069
        %v1086 = vrcp.pop %v1070
        %v1087 = vrcp.pop %v1071
        %v1088 = vrcp.pop %v1072
        %v1089 = vrcp.pop %v1073
        %v1090 = vrcp.pop %v1074
        %v1091 = vrcp.pop %v1075
        %v1092 = vrcp.pop %v1076
        %v1093 = vrcp.pop %v1077
        %v1094 = vrcp.pop %v1078
        %v1095 = vrcp.pop %v1079
        %v1096 = vrcp.pop %v1080
        %v1097 = vmul.f32 %v399, %v1081
        %v1098 = vmul.f32 %v400, %v1082
        %v1099 = vmul.f32 %v401, %v1083
        %v1100 = vmul.f32 %v402, %v1084
        %v1101 = vmul.f32 %v403, %v1085
        %v1102 = vmul.f32 %v404, %v1086
        %v1103 = vmul.f32 %v405, %v1087
        %v1104 = vmul.f32 %v406, %v1088
        %v1105 = vmul.f32 %v407, %v1089
        %v1106 = vmul.f32 %v408, %v1090
        %v1107 = vmul.f32 %v409, %v1091
        %v1108 = vmul.f32 %v410, %v1092
        %v1109 = vmul.f32 %v411, %v1093
        %v1110 = vmul.f32 %v412, %v1094
        %v1111 = vmul.f32 %v413, %v1095
        %v1112 = vmul.f32 %v414, %v1096
        %v1113 = vpack.c.bf16 %v1098, %v1097
        %v1114 = vpack.c.bf16 %v1100, %v1099
        %v1115 = vpack.c.bf16 %v1102, %v1101
        %v1116 = vpack.c.bf16 %v1104, %v1103
        %v1117 = vpack.c.bf16 %v1106, %v1105
        %v1118 = vpack.c.bf16 %v1108, %v1107
        %v1119 = vpack.c.bf16 %v1110, %v1109
        %v1120 = vpack.c.bf16 %v1112, %v1111
        %v1129 = vunpack.c.l.b16 %v1113
        %v1130 = vunpack.c.h.b16 %v1113
        %v1131 = vunpack.c.l.b16 %v1114
        %v1132 = vunpack.c.h.b16 %v1114
        %v1133 = vunpack.c.l.b16 %v1115
        %v1134 = vunpack.c.h.b16 %v1115
        %v1135 = vunpack.c.l.b16 %v1116
        %v1136 = vunpack.c.h.b16 %v1116
        %v1137 = vunpack.c.l.b16 %v1117
        %v1138 = vunpack.c.h.b16 %v1117
        %v1139 = vunpack.c.l.b16 %v1118
        %v1140 = vunpack.c.h.b16 %v1118
        %v1141 = vunpack.c.l.b16 %v1119
        %v1142 = vunpack.c.h.b16 %v1119
        %v1143 = vunpack.c.l.b16 %v1120
        %v1144 = vunpack.c.h.b16 %v1120
        %v1145 = vpack.c.b16 %v1129, %v1129
        %v1146 = vpack.c.b16 %v1130, %v1130
        %v1147 = vpack.c.b16 %v1131, %v1131
        %v1148 = vpack.c.b16 %v1132, %v1132
        %v1149 = vpack.c.b16 %v1133, %v1133
        %v1150 = vpack.c.b16 %v1134, %v1134
        %v1151 = vpack.c.b16 %v1135, %v1135
        %v1152 = vpack.c.b16 %v1136, %v1136
        %v1153 = vpack.c.b16 %v1137, %v1137
        %v1154 = vpack.c.b16 %v1138, %v1138
        %v1155 = vpack.c.b16 %v1139, %v1139
        %v1156 = vpack.c.b16 %v1140, %v1140
        %v1157 = vpack.c.b16 %v1141, %v1141
        %v1158 = vpack.c.b16 %v1142, %v1142
        %v1159 = vpack.c.b16 %v1143, %v1143
        %v1160 = vpack.c.b16 %v1144, %v1144
        %1177 = vst [vmem:[%s381] sm:$0xf] %v1145
        %1178 = vst [vmem:[%s381 + $0x4] sm:$0xf] %v1146
        %1179 = vst [vmem:[%s381 + $0x8] sm:$0xf] %v1147
        %1180 = vst [vmem:[%s381 + $0xc] sm:$0xf] %v1148
        %1181 = vst [vmem:[%s381 + $0x10] sm:$0xf] %v1149
        %1182 = vst [vmem:[%s381 + $0x14] sm:$0xf] %v1150
        %1183 = vst [vmem:[%s381 + $0x18] sm:$0xf] %v1151
        %1184 = vst [vmem:[%s381 + $0x1c] sm:$0xf] %v1152
        %1185 = vst [vmem:[%s381 + $0x20] sm:$0xf] %v1153
        %1186 = vst [vmem:[%s381 + $0x24] sm:$0xf] %v1154
        %1187 = vst [vmem:[%s381 + $0x28] sm:$0xf] %v1155
        %1188 = vst [vmem:[%s381 + $0x2c] sm:$0xf] %v1156
        %1189 = vst [vmem:[%s381 + $0x30] sm:$0xf] %v1157
        %1190 = vst [vmem:[%s381 + $0x34] sm:$0xf] %v1158
        %1191 = vst [vmem:[%s381 + $0x38] sm:$0xf] %v1159
        %1192 = vst [vmem:[%s381 + $0x3c] sm:$0xf] %v1160
        %s1193 = sand.u32 %s208, 1
        %s1194 = scalar_lea.sflag [#allocation4], %s1193
        %s1195 = sand.u32 %s208, 1
        %s1196 = smul.addr %s1195, 64
        %s1197 = scalar_lea.vmem [#allocation11], %s1196
        // Predicated region
        $region73: #{tpu_custom_call.1} parent=51 // pred_check
          %p1198 = pneg %p218
        $region74: #{tpu_custom_call.1} parent=51 // pred_check_branch
          %1200 = sbr.rel (%p1198) target = $region76
        $region75: #{tpu_custom_call.1} parent=51 // pred_region
          %s1202 = ssub.s32 1024, 1024
          %1203 = vsyncadd %s1194, %s1202
          %s1204 = smul.addr %s27, 16
          %s1205 = smul.addr %s1204, 64
          %s1206 = scalar_lea.hbm %s8, %s1205
          %s1207 = sshll.u32 %s1197, 4
          %s1208 = int_to_ptr.vmem [resolvable:$true] %s1207
          %1213 = dma.vmem_to_hbm [thread:$0]  %s1208, 1024, %s1206, %s1194, 64, 64, 4
        $region76: #{tpu_custom_call.1} parent=51 // pred_fallthru
          _
      $region52: #{tpu_custom_call.1} parent=5 // pred_fallthru
        _
      %p1214 = scmp.le.s32.totalorder 2, %s22
      // Predicated region
      $region77: #{tpu_custom_call.1} parent=5 // pred_check
        %p1215 = pneg %p1214
      $region78: #{tpu_custom_call.1} parent=5 // pred_check_branch
        %1217 = sbr.rel (%p1215) target = $region80
      $region79: #{tpu_custom_call.1} parent=5 // pred_region
        %s1218 = ssub.s32 %s22, 2
        // Predicated region
        $region81: #{tpu_custom_call.1} parent=79 // pred_check
          %p1219 = pneg %p224
        $region82: #{tpu_custom_call.1} parent=79 // pred_check_branch
          %1221 = sbr.rel (%p1219) target = $region84
        $region83: #{tpu_custom_call.1} parent=79 // pred_region
          %s1222 = sand.u32 %s209, 1
          %s1223 = scalar_lea.sflag [#allocation4], %s1222
          %s1224 = sand.u32 %s209, 1
          %s1225 = smul.addr %s1224, 64
          %s1226 = scalar_lea.vmem [#allocation11], %s1225
          %1227 = dma.done %s1223, 1024
        $region84: #{tpu_custom_call.1} parent=79 // pred_fallthru
          _
      $region80: #{tpu_custom_call.1} parent=5 // pred_fallthru
        _
    $region6: #{tpu_custom_call.1} parent=1 // loop_footer
      %s26 = sadd.s32 1, %s22
    $region7: #{tpu_custom_call.1} parent=1 // loop_footer_branch
      %21 = sbr.rel target = $region3
    $region8: #{tpu_custom_call.1} parent=1 // loop_exit
      _
    %1228 = vsyncpa [#allocation3], 1
    %s1229 = scalar_lea.sflag [#allocation3], 1
    %1230 = vsyncpa %s1229, 1
    %1231 = vsyncpa [#allocation6], 1
    %1232 = vsyncpa [#allocation9], 1
    %1233 = vsyncpa [#allocation4], 1
    %s1234 = scalar_lea.sflag [#allocation4], 1
    %1235 = vsyncpa %s1234, 1

</llo_original>
